<compile_context>
chip_gen: v7x
topology: tpu7x:2x2x1
jax: 0.10.0
libtpu: 0.0.40
codegen_flags: <defaults>
</compile_context>

<pallas_src>
import functools

import jax
import jax.numpy as jnp
from jax.experimental import pallas as pl
from jax.experimental.pallas import tpu as pltpu

ALPHA = 1.0  # t-distribution parameter (DEC default)
LANES = 128  # TPU lane width


def dec_kernel(x_ref, w1_ref, b1_ref, w2_ref, b2_ref, ct_ref, out_ref,
               *, n_clusters, alpha):
    # ---- encoder: Linear -> ReLU -> Linear (MXU matmuls, f32 accumulation) ----
    x = x_ref[...]                                                    # (TB, D_in)
    h = jnp.dot(x, w1_ref[...], preferred_element_type=jnp.float32)   # (TB, H)
    h = jnp.maximum(h + b1_ref[...], 0.0)
    z = jnp.dot(h, w2_ref[...], preferred_element_type=jnp.float32)   # (TB, E)
    z = z + b2_ref[...]

    # ---- ClusterAssignment: ||z - c||^2 in matmul form (MXU) ----
    ct = ct_ref[...]                                                  # (E, K_pad)
    z_sq = jnp.sum(z * z, axis=1, keepdims=True)                      # (TB, 1)
    c_sq = jnp.sum(ct * ct, axis=0, keepdims=True)                    # (1, K_pad)
    zc = jnp.dot(z, ct, preferred_element_type=jnp.float32)           # (TB, K_pad)
    # Clamp: cancellation in the expanded form can give tiny negatives.
    norm_sq = jnp.maximum(z_sq - 2.0 * zc + c_sq, 0.0)

    numerator = pl.reciprocal(1.0 + norm_sq * (1.0 / alpha), approx=False)
    power = float(alpha + 1.0) / 2.0
    if power != 1.0:  # trace-time constant: pow elided entirely for alpha == 1
        numerator = numerator ** power

    # Zero the padded cluster lanes so they do not perturb the normalization.
    k_pad = numerator.shape[-1]
    if n_clusters != k_pad:
        col = jax.lax.broadcasted_iota(jnp.int32, numerator.shape, 1)
        numerator = jnp.where(col < n_clusters, numerator, 0.0)

    denom = jnp.sum(numerator, axis=1, keepdims=True)                 # (TB, 1)
    out_ref[...] = numerator * pl.reciprocal(denom, approx=False)     # (TB, K_pad)


def dec_forward(x, w1, b1, w2, b2, centers, *, tb=128):
    B, D_in = x.shape
    H = w1.shape[1]
    E = w2.shape[1]
    K = centers.shape[0]

    # Lane-dense cluster axis: pad K up to a multiple of 128.
    K_pad = pl.cdiv(K, LANES) * LANES
    # Centers passed transposed (E, K_pad): contraction dim E, lane dim K_pad.
    ct = jnp.pad(centers.T, ((0, 0), (0, K_pad - K)))

    # Batch tiling (pad B to a multiple of the tile; padded rows sliced off).
    TB = min(tb, B)
    B_pad = pl.cdiv(B, TB) * TB
    if B_pad != B:
        x = jnp.pad(x, ((0, B_pad - B), (0, 0)))

    kernel = functools.partial(dec_kernel, n_clusters=K, alpha=ALPHA)

    flops = 2 * B_pad * (D_in * H + H * E + E * K_pad) + 12 * B_pad * K_pad
    bytes_accessed = 4 * (B_pad * D_in + D_in * H + H + H * E + E
                          + E * K_pad + B_pad * K_pad)
    cost = pl.CostEstimate(flops=flops, transcendentals=0,
                           bytes_accessed=bytes_accessed)

    out_padded = pl.pallas_call(
        kernel,
        out_shape=jax.ShapeDtypeStruct((B_pad, K_pad), jnp.float32),
        grid_spec=pltpu.PrefetchScalarGridSpec(
            num_scalar_prefetch=0,
            grid=(B_pad // TB,),
            in_specs=[
                pl.BlockSpec((TB, D_in), lambda i: (i, 0)),    # x: tiled over batch
                pl.BlockSpec((D_in, H), lambda i: (0, 0)),     # w1: resident
                pl.BlockSpec((1, H), lambda i: (0, 0)),        # b1: resident
                pl.BlockSpec((H, E), lambda i: (0, 0)),        # w2: resident
                pl.BlockSpec((1, E), lambda i: (0, 0)),        # b2: resident
                pl.BlockSpec((E, K_pad), lambda i: (0, 0)),    # centers^T: resident
            ],
            out_specs=pl.BlockSpec((TB, K_pad), lambda i: (i, 0)),
        ),
        compiler_params=pltpu.CompilerParams(
            dimension_semantics=("parallel",)),
        cost_estimate=cost,
    )(x, w1, b1, w2, b2, ct)

    return out_padded[:B, :K]


def dec_reference(x, w1, b1, w2, b2, centers):
    h = jnp.maximum(x @ w1 + b1, 0.0)
    z = h @ w2 + b2
    norm_sq = jnp.sum((z[:, None, :] - centers[None, :, :]) ** 2, axis=-1)
    num = (1.0 / (1.0 + norm_sq / ALPHA)) ** (float(ALPHA + 1.0) / 2.0)
    return num / jnp.sum(num, axis=1, keepdims=True)


if __name__ == "__main__":
    # Small shapes consistent with the module's forward pass (2 batch tiles).
    B, D_IN, HIDDEN, EMBED, K = 256, 64, 128, 32, 16

    key = jax.random.PRNGKey(0)
    kx, kw1, kw2, kc = jax.random.split(key, 4)

    x = jax.random.normal(kx, (B, D_IN), dtype=jnp.float32)

    # Deterministic "xavier-uniform"-style init for encoder + cluster centers.
    def xavier(k, shape):
        fan_in, fan_out = shape[0], shape[1]
        limit = jnp.sqrt(6.0 / (fan_in + fan_out))
        return jax.random.uniform(k, shape, jnp.float32, -limit, limit)

    w1 = xavier(kw1, (D_IN, HIDDEN))
    b1 = jnp.zeros((1, HIDDEN), jnp.float32)
    w2 = xavier(kw2, (HIDDEN, EMBED))
    b2 = jnp.zeros((1, EMBED), jnp.float32)
    centers = xavier(kc, (K, EMBED))  # nn.init.xavier_uniform_ on (K, E)

    out = dec_forward(x, w1, b1, w2, b2, centers)
    out = jax.block_until_ready(out)

    ref = dec_reference(x, w1, b1, w2, b2, centers)
    assert out.shape == (B, K)
    assert jnp.allclose(out, ref, atol=1e-5, rtol=1e-5), \
        float(jnp.max(jnp.abs(out - ref)))
    # Soft assignments: each row sums to 1.
    assert jnp.allclose(jnp.sum(out, axis=1), jnp.ones((B,)), atol=1e-5)

    print("KERNEL_OK")
</pallas_src>

<mosaic_0001>
module attributes {stable_mosaic.version = 11 : i64} {
  func.func @dec_kernel(%arg0: i32, %arg1: memref<128x64xf32, #tpu.memory_space<vmem>>, %arg2: memref<64x128xf32, #tpu.memory_space<vmem>>, %arg3: memref<1x128xf32, #tpu.memory_space<vmem>>, %arg4: memref<128x32xf32, #tpu.memory_space<vmem>>, %arg5: memref<1x32xf32, #tpu.memory_space<vmem>>, %arg6: memref<32x128xf32, #tpu.memory_space<vmem>>, %arg7: memref<128x128xf32, #tpu.memory_space<vmem>>) attributes {dimension_semantics = [#tpu.dimension_semantics<parallel>], iteration_bounds = array<i64: 2>, scalar_prefetch = 0 : i64, scratch_operands = 0 : i64, tpu.core_type = #tpu.core_type<tc>, window_params = [{transform_indices = @transform_0, window_bounds = array<i64: 128, 64>}, {pipeline_mode = #tpu.pipeline_mode<synchronous>, transform_indices = @transform_1, window_bounds = array<i64: 64, 128>}, {pipeline_mode = #tpu.pipeline_mode<synchronous>, transform_indices = @transform_2, window_bounds = array<i64: 1, 128>}, {pipeline_mode = #tpu.pipeline_mode<synchronous>, transform_indices = @transform_3, window_bounds = array<i64: 128, 32>}, {pipeline_mode = #tpu.pipeline_mode<synchronous>, transform_indices = @transform_4, window_bounds = array<i64: 1, 32>}, {pipeline_mode = #tpu.pipeline_mode<synchronous>, transform_indices = @transform_5, window_bounds = array<i64: 32, 128>}, {transform_indices = @transform_6, window_bounds = array<i64: 128, 128>}]} {
    %c0 = arith.constant 0 : index
    %c0_0 = arith.constant 0 : index
    %0 = vector.load %arg1[%c0, %c0_0] : memref<128x64xf32, #tpu.memory_space<vmem>>, vector<128x64xf32>
    %c0_1 = arith.constant 0 : index
    %c0_2 = arith.constant 0 : index
    %1 = vector.load %arg2[%c0_1, %c0_2] : memref<64x128xf32, #tpu.memory_space<vmem>>, vector<64x128xf32>
    %cst = arith.constant dense<0.000000e+00> : vector<128x128xf32>
    %2 = tpu.matmul %0, %1, %cst {dimension_numbers = #tpu.dot_dimension_numbers<[1], [0], [0], [1], [0, 0, 1, 1], [], []>} : vector<128x64xf32>, vector<64x128xf32>, vector<128x128xf32> -> vector<128x128xf32>
    %c0_3 = arith.constant 0 : index
    %c0_4 = arith.constant 0 : index
    %3 = vector.load %arg3[%c0_3, %c0_4] : memref<1x128xf32, #tpu.memory_space<vmem>>, vector<1x128xf32>
    %4 = vector.broadcast %3 : vector<1x128xf32> to vector<128x128xf32>
    %5 = arith.addf %2, %4 : vector<128x128xf32>
    %cst_5 = arith.constant 0.000000e+00 : f32
    %6 = vector.broadcast %cst_5 : f32 to vector<128x128xf32>
    %7 = arith.maximumf %5, %6 : vector<128x128xf32>
    %c0_6 = arith.constant 0 : index
    %c0_7 = arith.constant 0 : index
    %8 = vector.load %arg4[%c0_6, %c0_7] : memref<128x32xf32, #tpu.memory_space<vmem>>, vector<128x32xf32>
    %cst_8 = arith.constant dense<0.000000e+00> : vector<128x32xf32>
    %9 = tpu.matmul %7, %8, %cst_8 {dimension_numbers = #tpu.dot_dimension_numbers<[1], [0], [0], [1], [0, 0, 1, 1], [], []>} : vector<128x128xf32>, vector<128x32xf32>, vector<128x32xf32> -> vector<128x32xf32>
    %c0_9 = arith.constant 0 : index
    %c0_10 = arith.constant 0 : index
    %10 = vector.load %arg5[%c0_9, %c0_10] : memref<1x32xf32, #tpu.memory_space<vmem>>, vector<1x32xf32>
    %11 = vector.broadcast %10 : vector<1x32xf32> to vector<128x32xf32>
    %12 = arith.addf %9, %11 : vector<128x32xf32>
    %c0_11 = arith.constant 0 : index
    %c0_12 = arith.constant 0 : index
    %13 = vector.load %arg6[%c0_11, %c0_12] : memref<32x128xf32, #tpu.memory_space<vmem>>, vector<32x128xf32>
    %14 = arith.mulf %12, %12 : vector<128x32xf32>
    %cst_13 = arith.constant dense<0.000000e+00> : vector<128xf32>
    %15 = vector.multi_reduction <add>, %14, %cst_13 [1] : vector<128x32xf32> to vector<128xf32>
    %16 = vector.shape_cast %15 : vector<128xf32> to vector<128x1xf32>
    %17 = arith.mulf %13, %13 : vector<32x128xf32>
    %cst_14 = arith.constant dense<0.000000e+00> : vector<128xf32>
    %18 = vector.multi_reduction <add>, %17, %cst_14 [0] : vector<32x128xf32> to vector<128xf32>
    %19 = vector.shape_cast %18 : vector<128xf32> to vector<1x128xf32>
    %cst_15 = arith.constant dense<0.000000e+00> : vector<128x128xf32>
    %20 = tpu.matmul %12, %13, %cst_15 {dimension_numbers = #tpu.dot_dimension_numbers<[1], [0], [0], [1], [0, 0, 1, 1], [], []>} : vector<128x32xf32>, vector<32x128xf32>, vector<128x128xf32> -> vector<128x128xf32>
    %cst_16 = arith.constant 2.000000e+00 : f32
    %21 = vector.broadcast %cst_16 : f32 to vector<128x128xf32>
    %22 = arith.mulf %21, %20 : vector<128x128xf32>
    %23 = vector.broadcast %16 : vector<128x1xf32> to vector<128x128xf32>
    %24 = arith.subf %23, %22 : vector<128x128xf32>
    %25 = vector.broadcast %19 : vector<1x128xf32> to vector<128x128xf32>
    %26 = arith.addf %24, %25 : vector<128x128xf32>
    %cst_17 = arith.constant 0.000000e+00 : f32
    %27 = vector.broadcast %cst_17 : f32 to vector<128x128xf32>
    %28 = arith.maximumf %26, %27 : vector<128x128xf32>
    %cst_18 = arith.constant 1.000000e+00 : f32
    %29 = vector.broadcast %cst_18 : f32 to vector<128x128xf32>
    %30 = arith.mulf %28, %29 : vector<128x128xf32>
    %cst_19 = arith.constant 1.000000e+00 : f32
    %31 = vector.broadcast %cst_19 : f32 to vector<128x128xf32>
    %32 = arith.addf %31, %30 : vector<128x128xf32>
    %33 = tpu.reciprocal %32 : vector<128x128xf32> -> vector<128x128xf32>
    %34 = tpu.iota {dimensions = array<i32: 1>} : vector<128x128xi32>
    %c16_i32 = arith.constant 16 : i32
    %35 = vector.broadcast %c16_i32 : i32 to vector<128x128xi32>
    %36 = arith.cmpi slt, %34, %35 : vector<128x128xi32>
    %cst_20 = arith.constant 0.000000e+00 : f32
    %37 = vector.broadcast %cst_20 : f32 to vector<128x128xf32>
    %38 = arith.select %36, %33, %37 : vector<128x128xi1>, vector<128x128xf32>
    %cst_21 = arith.constant dense<0.000000e+00> : vector<128xf32>
    %39 = vector.multi_reduction <add>, %38, %cst_21 [1] : vector<128x128xf32> to vector<128xf32>
    %40 = vector.shape_cast %39 : vector<128xf32> to vector<128x1xf32>
    %41 = tpu.reciprocal %40 : vector<128x1xf32> -> vector<128x1xf32>
    %42 = vector.broadcast %41 : vector<128x1xf32> to vector<128x128xf32>
    %43 = arith.mulf %38, %42 : vector<128x128xf32>
    %c0_22 = arith.constant 0 : index
    %c0_23 = arith.constant 0 : index
    %44 = vector.load %arg7[%c0_22, %c0_23] : memref<128x128xf32, #tpu.memory_space<vmem>>, vector<128x128xf32>
    tpu.vector_store %arg7[%c0_22, %c0_23], %43 {strides = array<i32>} : memref<128x128xf32, #tpu.memory_space<vmem>>, vector<128x128xf32>,
    return
  }
  func.func @transform_0(%arg0: i32) -> (i32, i32) {
    %c0_i32 = arith.constant 0 : i32
    %c0_i32_0 = arith.constant 0 : i32
    return %arg0, %c0_i32 : i32, i32
  }
  func.func @transform_1(%arg0: i32) -> (i32, i32) {
    %c0_i32 = arith.constant 0 : i32
    %c0_i32_0 = arith.constant 0 : i32
    %c0_i32_1 = arith.constant 0 : i32
    return %c0_i32, %c0_i32_0 : i32, i32
  }
  func.func @transform_2(%arg0: i32) -> (i32, i32) {
    %c0_i32 = arith.constant 0 : i32
    %c0_i32_0 = arith.constant 0 : i32
    %c0_i32_1 = arith.constant 0 : i32
    return %c0_i32, %c0_i32_0 : i32, i32
  }
  func.func @transform_3(%arg0: i32) -> (i32, i32) {
    %c0_i32 = arith.constant 0 : i32
    %c0_i32_0 = arith.constant 0 : i32
    %c0_i32_1 = arith.constant 0 : i32
    return %c0_i32, %c0_i32_0 : i32, i32
  }
  func.func @transform_4(%arg0: i32) -> (i32, i32) {
    %c0_i32 = arith.constant 0 : i32
    %c0_i32_0 = arith.constant 0 : i32
    %c0_i32_1 = arith.constant 0 : i32
    return %c0_i32, %c0_i32_0 : i32, i32
  }
  func.func @transform_5(%arg0: i32) -> (i32, i32) {
    %c0_i32 = arith.constant 0 : i32
    %c0_i32_0 = arith.constant 0 : i32
    %c0_i32_1 = arith.constant 0 : i32
    return %c0_i32, %c0_i32_0 : i32, i32
  }
  func.func @transform_6(%arg0: i32) -> (i32, i32) {
    %c0_i32 = arith.constant 0 : i32
    %c0_i32_0 = arith.constant 0 : i32
    return %arg0, %c0_i32 : i32, i32
  }
}

</mosaic_0001>

<llo_original>
// kernel: tpu_custom_call.1
$region0: #{tpu_custom_call.1}
  #allocation0 [shape = 'u32[]', space=smem, size = 0x4, offset = 0x4, fixed_abs, tag = 'smem constant byte address 0x4 - core index']
  #allocation1 [shape = 'u32[144,128]{1,0:T(1,128)}', space=vmem, size = 0x12000, scoped, tag = 'internal scratch']
  %s0 = inlined_call_operand.vmem [shape: f32[256,64], index: 0, kind: input, shape index: {}]
  %s1 = inlined_call_operand.vmem [shape: f32[64,128], index: 1, kind: input, shape index: {}]
  %s2 = inlined_call_operand.vmem [shape: f32[1,128], index: 2, kind: input, shape index: {}]
  %s3 = inlined_call_operand.vmem [shape: f32[128,32], index: 3, kind: input, shape index: {}]
  %s4 = inlined_call_operand.vmem [shape: f32[1,32], index: 4, kind: input, shape index: {}]
  %s5 = inlined_call_operand.vmem [shape: f32[32,128], index: 5, kind: input, shape index: {}]
  %s6 = inlined_call_operand.hbm [shape: f32[256,128], index: 6, kind: output, shape index: {}]
  %s7 = sld [smem:[#allocation0]]
  $region57: #{tpu_custom_call.1} parent=0
    _
  %s9 = ssub.s32 1, %s7
  %s10 = scalar_select 0, %s9, %s7
  $region1: #{tpu_custom_call.1} parent=0
    #allocation2 [shape = 'u8[131072]{0}', space=vmem, size = 0x20000, scoped, tag = 'output window, operand 0']
    #allocation3 [shape = 's32[2]{0}', space=sflag, size = 0x8, scoped, tag = 'scoped memory for tpu_custom_call.1']
    %11 = vsyncpa [#allocation3], 0
    %s12 = scalar_lea.sflag [#allocation3], 1
    %13 = vsyncpa %s12, 0
    loop: start=0, step=1, limit=4
    $region2: #{tpu_custom_call.1} parent=1 // loop_pre_header
      _
    $region3: #{tpu_custom_call.1} parent=1 // loop_header
      %s15 = sphi 0, %s19
      %p16 = scmp.ge.s32.totalorder %s15, 4
      %s25 = sphi 0, %s27
      %s28 = sphi 0, %s25
      %s29 = sphi 0, %s28
      %s45 = sphi 0, %s29
      %s49 = sphi 0, %s49
      %s51 = sphi 0, %s49
      %s52 = sphi 0, %s51
      %s66 = sphi 0, %s52
      %s70 = sphi 0, %s70
      %s72 = sphi 0, %s70
      %s73 = sphi 0, %s72
      %s87 = sphi 0, %s73
      %s91 = sphi 0, %s91
      %s93 = sphi 0, %s91
      %s94 = sphi 0, %s93
      %s108 = sphi 0, %s94
      %s112 = sphi 0, %s112
      %s114 = sphi 0, %s112
      %s115 = sphi 0, %s114
      %s129 = sphi 0, %s115
      %s133 = sphi 0, %s133
      %s135 = sphi 0, %s133
      %s136 = sphi 0, %s135
      %s150 = sphi 0, %s136
      %s156 = sphi 0, %s158
      %s159 = sphi 0, %s156
      %s160 = sphi 0, %s159
      %s176 = sphi 0, %s160
    $region4: #{tpu_custom_call.1} parent=1 // loop_header_branch
      %18 = sbr.rel (%p16) target = $region8
    $region5: #{tpu_custom_call.1} parent=1 // loop_body
      %s20 = ssub.s32 %s15, 1
      %s21 = ssub.s32 %s15, 2
      %s22 = sadd.s32 %s15, 1
      %s23 = ssub.s32 %s15, %s22
      %p24 = scmp.eq.s32.totalorder %s23, 0
      %s26 = sadd.s32 %s25, 1
      %s27 = scalar_select %p24, %s25, %s26
      %p30 = pneg %p24
      %p31 = scmp.eq.s32.totalorder %s15, 1
      %p32 = por %p30, %p31
      %p33 = scmp.ne.s32.totalorder %s25, %s28
      %p34 = scmp.eq.s32.totalorder %s15, 0
      %p35 = por %p33, %p34
      %p36 = scmp.ne.s32.totalorder %s25, %s28
      %p37 = scmp.eq.s32.totalorder %s20, 1
      %p38 = por %p36, %p37
      %p39 = scmp.ne.s32.totalorder %s28, %s29
      %p40 = scmp.eq.s32.totalorder %s20, 0
      %p41 = por %p39, %p40
      %p42 = scmp.ne.s32.totalorder %s28, %s29
      %p43 = scmp.eq.s32.totalorder %s21, 1
      %p44 = por %p42, %p43
      %p46 = scmp.ne.s32.totalorder %s29, %s45
      %p47 = scmp.eq.s32.totalorder %s21, 0
      %p48 = por %p46, %p47
      %s50 = sadd.s32 %s49, 1
      %p53 = scmp.eq.s32.totalorder %s15, 1
      %p54 = scmp.ne.s32.totalorder %s49, %s51
      %p55 = scmp.eq.s32.totalorder %s15, 0
      %p56 = por %p54, %p55
      %p57 = scmp.ne.s32.totalorder %s49, %s51
      %p58 = scmp.eq.s32.totalorder %s20, 1
      %p59 = por %p57, %p58
      %p60 = scmp.ne.s32.totalorder %s51, %s52
      %p61 = scmp.eq.s32.totalorder %s20, 0
      %p62 = por %p60, %p61
      %p63 = scmp.ne.s32.totalorder %s51, %s52
      %p64 = scmp.eq.s32.totalorder %s21, 1
      %p65 = por %p63, %p64
      %p67 = scmp.ne.s32.totalorder %s52, %s66
      %p68 = scmp.eq.s32.totalorder %s21, 0
      %p69 = por %p67, %p68
      %s71 = sadd.s32 %s70, 1
      %p74 = scmp.eq.s32.totalorder %s15, 1
      %p75 = scmp.ne.s32.totalorder %s70, %s72
      %p76 = scmp.eq.s32.totalorder %s15, 0
      %p77 = por %p75, %p76
      %p78 = scmp.ne.s32.totalorder %s70, %s72
      %p79 = scmp.eq.s32.totalorder %s20, 1
      %p80 = por %p78, %p79
      %p81 = scmp.ne.s32.totalorder %s72, %s73
      %p82 = scmp.eq.s32.totalorder %s20, 0
      %p83 = por %p81, %p82
      %p84 = scmp.ne.s32.totalorder %s72, %s73
      %p85 = scmp.eq.s32.totalorder %s21, 1
      %p86 = por %p84, %p85
      %p88 = scmp.ne.s32.totalorder %s73, %s87
      %p89 = scmp.eq.s32.totalorder %s21, 0
      %p90 = por %p88, %p89
      %s92 = sadd.s32 %s91, 1
      %p95 = scmp.eq.s32.totalorder %s15, 1
      %p96 = scmp.ne.s32.totalorder %s91, %s93
      %p97 = scmp.eq.s32.totalorder %s15, 0
      %p98 = por %p96, %p97
      %p99 = scmp.ne.s32.totalorder %s91, %s93
      %p100 = scmp.eq.s32.totalorder %s20, 1
      %p101 = por %p99, %p100
      %p102 = scmp.ne.s32.totalorder %s93, %s94
      %p103 = scmp.eq.s32.totalorder %s20, 0
      %p104 = por %p102, %p103
      %p105 = scmp.ne.s32.totalorder %s93, %s94
      %p106 = scmp.eq.s32.totalorder %s21, 1
      %p107 = por %p105, %p106
      %p109 = scmp.ne.s32.totalorder %s94, %s108
      %p110 = scmp.eq.s32.totalorder %s21, 0
      %p111 = por %p109, %p110
      %s113 = sadd.s32 %s112, 1
      %p116 = scmp.eq.s32.totalorder %s15, 1
      %p117 = scmp.ne.s32.totalorder %s112, %s114
      %p118 = scmp.eq.s32.totalorder %s15, 0
      %p119 = por %p117, %p118
      %p120 = scmp.ne.s32.totalorder %s112, %s114
      %p121 = scmp.eq.s32.totalorder %s20, 1
      %p122 = por %p120, %p121
      %p123 = scmp.ne.s32.totalorder %s114, %s115
      %p124 = scmp.eq.s32.totalorder %s20, 0
      %p125 = por %p123, %p124
      %p126 = scmp.ne.s32.totalorder %s114, %s115
      %p127 = scmp.eq.s32.totalorder %s21, 1
      %p128 = por %p126, %p127
      %p130 = scmp.ne.s32.totalorder %s115, %s129
      %p131 = scmp.eq.s32.totalorder %s21, 0
      %p132 = por %p130, %p131
      %s134 = sadd.s32 %s133, 1
      %p137 = scmp.eq.s32.totalorder %s15, 1
      %p138 = scmp.ne.s32.totalorder %s133, %s135
      %p139 = scmp.eq.s32.totalorder %s15, 0
      %p140 = por %p138, %p139
      %p141 = scmp.ne.s32.totalorder %s133, %s135
      %p142 = scmp.eq.s32.totalorder %s20, 1
      %p143 = por %p141, %p142
      %p144 = scmp.ne.s32.totalorder %s135, %s136
      %p145 = scmp.eq.s32.totalorder %s20, 0
      %p146 = por %p144, %p145
      %p147 = scmp.ne.s32.totalorder %s135, %s136
      %p148 = scmp.eq.s32.totalorder %s21, 1
      %p149 = por %p147, %p148
      %p151 = scmp.ne.s32.totalorder %s136, %s150
      %p152 = scmp.eq.s32.totalorder %s21, 0
      %p153 = por %p151, %p152
      %s154 = ssub.s32 %s15, %s22
      %p155 = scmp.eq.s32.totalorder %s154, 0
      %s157 = sadd.s32 %s156, 1
      %s158 = scalar_select %p155, %s156, %s157
      %p161 = pneg %p155
      %p162 = scmp.eq.s32.totalorder %s15, 1
      %p163 = por %p161, %p162
      %p164 = scmp.ne.s32.totalorder %s156, %s159
      %p165 = scmp.eq.s32.totalorder %s15, 0
      %p166 = por %p164, %p165
      %p167 = scmp.ne.s32.totalorder %s156, %s159
      %p168 = scmp.eq.s32.totalorder %s20, 1
      %p169 = por %p167, %p168
      %p170 = scmp.ne.s32.totalorder %s159, %s160
      %p171 = scmp.eq.s32.totalorder %s20, 0
      %p172 = por %p170, %p171
      %p173 = scmp.ne.s32.totalorder %s159, %s160
      %p174 = scmp.eq.s32.totalorder %s21, 1
      %p175 = por %p173, %p174
      %p177 = scmp.ne.s32.totalorder %s160, %s176
      %p178 = scmp.eq.s32.totalorder %s21, 0
      %p179 = por %p177, %p178
      %p180 = scmp.le.s32.totalorder 1, %s15
      %p181 = scmp.lt.s32.totalorder %s15, 3
      %p182 = pnand %p180, %p181
      %p183 = pneg %p182
      // Predicated region
      $region9: #{tpu_custom_call.1} parent=5 // pred_check
        _
      $region10: #{tpu_custom_call.1} parent=5 // pred_check_branch
        %185 = sbr.rel (%p182) target = $region12
      $region11: #{tpu_custom_call.1} parent=5 // pred_region
        %s186 = ssub.s32 %s15, 1
        // Predicated region
        $region13: #{tpu_custom_call.1} parent=11 // pred_check
          %p187 = pneg %p62
        $region14: #{tpu_custom_call.1} parent=11 // pred_check_branch
          %189 = sbr.rel (%p187) target = $region16
        $region15: #{tpu_custom_call.1} parent=11 // pred_region
          _
        $region16: #{tpu_custom_call.1} parent=11 // pred_fallthru
          _
        // Predicated region
        $region17: #{tpu_custom_call.1} parent=11 // pred_check
          %p190 = pneg %p83
        $region18: #{tpu_custom_call.1} parent=11 // pred_check_branch
          %192 = sbr.rel (%p190) target = $region20
        $region19: #{tpu_custom_call.1} parent=11 // pred_region
          _
        $region20: #{tpu_custom_call.1} parent=11 // pred_fallthru
          _
        // Predicated region
        $region21: #{tpu_custom_call.1} parent=11 // pred_check
          %p193 = pneg %p104
        $region22: #{tpu_custom_call.1} parent=11 // pred_check_branch
          %195 = sbr.rel (%p193) target = $region24
        $region23: #{tpu_custom_call.1} parent=11 // pred_region
          _
        $region24: #{tpu_custom_call.1} parent=11 // pred_fallthru
          _
        // Predicated region
        $region25: #{tpu_custom_call.1} parent=11 // pred_check
          %p196 = pneg %p125
        $region26: #{tpu_custom_call.1} parent=11 // pred_check_branch
          %198 = sbr.rel (%p196) target = $region28
        $region27: #{tpu_custom_call.1} parent=11 // pred_region
          _
        $region28: #{tpu_custom_call.1} parent=11 // pred_fallthru
          _
        // Predicated region
        $region29: #{tpu_custom_call.1} parent=11 // pred_check
          %p199 = pneg %p146
        $region30: #{tpu_custom_call.1} parent=11 // pred_check_branch
          %201 = sbr.rel (%p199) target = $region32
        $region31: #{tpu_custom_call.1} parent=11 // pred_region
          _
        $region32: #{tpu_custom_call.1} parent=11 // pred_fallthru
          _
      $region12: #{tpu_custom_call.1} parent=5 // pred_fallthru
        _
      %p202 = scmp.lt.s32.totalorder %s15, 2
      // Predicated region
      $region33: #{tpu_custom_call.1} parent=5 // pred_check
        %p203 = pneg %p202
      $region34: #{tpu_custom_call.1} parent=5 // pred_check_branch
        %205 = sbr.rel (%p203) target = $region36
      $region35: #{tpu_custom_call.1} parent=5 // pred_region
        // Predicated region
        $region37: #{tpu_custom_call.1} parent=35 // pred_check
          %p206 = pneg %p35
        $region38: #{tpu_custom_call.1} parent=35 // pred_check_branch
          %208 = sbr.rel (%p206) target = $region40
        $region39: #{tpu_custom_call.1} parent=35 // pred_region
          %s209 = smul.u32 16, %s15
          %p210 = scmp.lt.s32.totalorder %s209, 31
          %s211 = scalar_select %p210, %s209, 31
          %s212 = smul.addr %s211, 8
          %s213 = scalar_lea.vmem %s0, %s212
          %s214 = smul.u32 16, %s15
        $region40: #{tpu_custom_call.1} parent=35 // pred_fallthru
          _
      $region36: #{tpu_custom_call.1} parent=5 // pred_fallthru
        _
      %p215 = scmp.le.s32.totalorder 1, %s15
      %p216 = scmp.lt.s32.totalorder %s15, 3
      %p217 = pnand %p215, %p216
      %p218 = pneg %p217
      // Predicated region
      $region41: #{tpu_custom_call.1} parent=5 // pred_check
        _
      $region42: #{tpu_custom_call.1} parent=5 // pred_check_branch
        %220 = sbr.rel (%p217) target = $region44
      $region43: #{tpu_custom_call.1} parent=5 // pred_region
        %s221 = ssub.s32 %s15, 1
        %s222 = smul.u32 16, %s20
        %p223 = scmp.lt.s32.totalorder %s222, 31
        %s224 = scalar_select %p223, %s222, 31
        %s225 = smul.addr %s224, 8
        %s226 = scalar_lea.vmem %s0, %s225
        %p227 = pneg %p41
        %p228 = pneg %p38
        %p229 = pneg %p62
        %p230 = pneg %p59
        %p231 = pneg %p83
        %p232 = pneg %p80
        %p233 = pneg %p104
        %p234 = pneg %p101
        %p235 = pneg %p125
        %p236 = pneg %p122
        %p237 = pneg %p146
        %p238 = pneg %p143
        %p239 = pneg %p172
        %p240 = pneg %p169
        %s241 = sand.u32 %s159, 1
        %s242 = scalar_lea.sflag [#allocation3], %s241
        %s243 = sand.u32 %s159, 1
        %s244 = smul.addr %s243, 128
        %s245 = scalar_lea.vmem [#allocation2], %s244
        %s246 = smul.u32 16, %s20
        %p247 = scmp.lt.s32.totalorder %s246, 31
        %s248 = scalar_select %p247, %s246, 31
        %s249 = smul.addr %s248, 8
        %s250 = scalar_lea.vmem %s0, %s249
        %s251 = smul.u32 16, %s20
        %s252 = smul.u32 16, %s20
        %v253 = vld [vmem:[%s250] sm:$0xff]
        %v254 = vld [vmem:[%s250 + $0x8] sm:$0xff]
        %v255 = vld [vmem:[%s250 + $0x10] sm:$0xff]
        %v256 = vld [vmem:[%s250 + $0x18] sm:$0xff]
        %v257 = vld [vmem:[%s250 + $0x20] sm:$0xff]
        %v258 = vld [vmem:[%s250 + $0x28] sm:$0xff]
        %v259 = vld [vmem:[%s250 + $0x30] sm:$0xff]
        %v260 = vld [vmem:[%s250 + $0x38] sm:$0xff]
        %v261 = vld [vmem:[%s250 + $0x40] sm:$0xff]
        %v262 = vld [vmem:[%s250 + $0x48] sm:$0xff]
        %v263 = vld [vmem:[%s250 + $0x50] sm:$0xff]
        %v264 = vld [vmem:[%s250 + $0x58] sm:$0xff]
        %v265 = vld [vmem:[%s250 + $0x60] sm:$0xff]
        %v266 = vld [vmem:[%s250 + $0x68] sm:$0xff]
        %v267 = vld [vmem:[%s250 + $0x70] sm:$0xff]
        %v268 = vld [vmem:[%s250 + $0x78] sm:$0xff]
        %v269 = vld [vmem:[%s1] sm:$0xff]
        %v270 = vld [vmem:[%s1 + $0x8] sm:$0xff]
        %v271 = vld [vmem:[%s1 + $0x10] sm:$0xff]
        %v272 = vld [vmem:[%s1 + $0x18] sm:$0xff]
        %v273 = vld [vmem:[%s1 + $0x20] sm:$0xff]
        %v274 = vld [vmem:[%s1 + $0x28] sm:$0xff]
        %v275 = vld [vmem:[%s1 + $0x30] sm:$0xff]
        %v276 = vld [vmem:[%s1 + $0x38] sm:$0xff]
        %v277 = vld [vmem:[%s2] sm:$0x1]
        %v279 = vlaneseq
        %v280 = vshrl.u32 %v279, 7
        %v281 = vsub.s32 0, %v280
        %v282 = vrot.slane %v277, %v281
        %vm284 = vcmask 523264
        %v286 = vsel %vm284, %v253, 0
        %v289 = vsel %vm284, %v254, 0
        %v292 = vsel %vm284, %v255, 0
        %v295 = vsel %vm284, %v256, 0
        %v298 = vsel %vm284, %v257, 0
        %v301 = vsel %vm284, %v258, 0
        %v304 = vsel %vm284, %v259, 0
        %v307 = vsel %vm284, %v260, 0
        %v310 = vsel %vm284, %v261, 0
        %v313 = vsel %vm284, %v262, 0
        %v316 = vsel %vm284, %v263, 0
        %v319 = vsel %vm284, %v264, 0
        %v322 = vsel %vm284, %v265, 0
        %v325 = vsel %vm284, %v266, 0
        %v328 = vsel %vm284, %v267, 0
        %v331 = vsel %vm284, %v268, 0
        %333 = vmatprep.subr.mxu0 0.0
        %334 = vmatpush1.msra.mxu0 %v269
        %335 = vmatprep.subr.mxu0 0.0
        %336 = vmatpush1.msra.mxu0 %v270
        %337 = vmatprep.subr.mxu0 0.0
        %338 = vmatpush1.msra.mxu0 %v271
        %339 = vmatprep.subr.mxu0 0.0
        %340 = vmatpush1.msra.mxu0 %v272
        %341 = vmatprep.subr.mxu0 0.0
        %342 = vmatpush1.msra.mxu0 %v273
        %343 = vmatprep.subr.mxu0 0.0
        %344 = vmatpush1.msra.mxu0 %v274
        %345 = vmatprep.subr.mxu0 0.0
        %346 = vmatpush1.msra.mxu0 %v275
        %347 = vmatprep.subr.mxu0 0.0
        %348 = vmatpush1.msra.mxu0 %v276
        %349 = vmatprep.subr.mxu0 0.0
        %350 = vmatpush1.msra.mxu0 0.0
        %351 = vmatprep.subr.mxu0 0.0
        %352 = vmatpush1.msra.mxu0 0.0
        %353 = vmatprep.subr.mxu0 0.0
        %354 = vmatpush1.msra.mxu0 0.0
        %355 = vmatprep.subr.mxu0 0.0
        %356 = vmatpush1.msra.mxu0 0.0
        %357 = vmatprep.subr.mxu0 0.0
        %358 = vmatpush1.msra.mxu0 0.0
        %359 = vmatprep.subr.mxu0 0.0
        %360 = vmatpush1.msra.mxu0 0.0
        %361 = vmatprep.subr.mxu0 0.0
        %362 = vmatpush1.msra.mxu0 0.0
        %363 = vmatprep.subr.mxu0 0.0
        %364 = vmatpush1.msra.mxu0 0.0
        %365 = vmatprep.subr.mxu0 0.0
        %366 = vmatpush1.msra.mxu0 0.0
        %367 = vmatprep.subr.mxu0 0.0
        %368 = vmatpush1.msra.mxu0 0.0
        %369 = vmatprep.subr.mxu0 0.0
        %370 = vmatpush1.msra.mxu0 0.0
        %371 = vmatprep.subr.mxu0 0.0
        %372 = vmatpush1.msra.mxu0 0.0
        %373 = vmatprep.subr.mxu0 0.0
        %374 = vmatpush1.msra.mxu0 0.0
        %375 = vmatprep.subr.mxu0 0.0
        %376 = vmatpush1.msra.mxu0 0.0
        %377 = vmatprep.subr.mxu0 0.0
        %378 = vmatpush1.msra.mxu0 0.0
        %379 = vmatprep.subr.mxu0 0.0
        %380 = vmatpush1.msra.mxu0 0.0
        %381 = vmatprep.subr.mxu0 0.0
        %382 = vmatpush1.msra.mxu0 0.0
        %383 = vmatprep.subr.mxu0 0.0
        %384 = vmatpush1.msra.mxu0 0.0
        %385 = vmatprep.subr.mxu0 0.0
        %386 = vmatpush1.msra.mxu0 0.0
        %387 = vmatprep.subr.mxu0 0.0
        %388 = vmatpush1.msra.mxu0 0.0
        %389 = vmatprep.subr.mxu0 0.0
        %390 = vmatpush1.msra.mxu0 0.0
        %391 = vmatprep.subr.mxu0 0.0
        %392 = vmatpush1.msra.mxu0 0.0
        %393 = vmatprep.subr.mxu0 0.0
        %394 = vmatpush1.msra.mxu0 0.0
        %395 = vmatprep.subr.mxu0 0.0
        %396 = vmatpush1.msra.mxu0 0.0
        %397 = vmatprep.mubr.f32.mxu0 0.0
        %398 = vmatmul.mubr.f32.gmra.mrb[0].mxu0 %v286
        %v399 = vpop.f32.mrb[0].mxu0
        %v400 = vadd.f32 %v282, %v399
        %v401 = vpop.f32.mrb[0].mxu0
        %402 = vmatprep.mubr.f32.mxu0 0.0
        %403 = vmatmul.mubr.f32.gmra.mrb[0].mxu0 %v289
        %v404 = vpop.f32.mrb[0].mxu0
        %v405 = vadd.f32 %v282, %v404
        %v406 = vpop.f32.mrb[0].mxu0
        %407 = vmatprep.mubr.f32.mxu0 0.0
        %408 = vmatmul.mubr.f32.gmra.mrb[0].mxu0 %v292
        %v409 = vpop.f32.mrb[0].mxu0
        %v410 = vadd.f32 %v282, %v409
        %v411 = vpop.f32.mrb[0].mxu0
        %412 = vmatprep.mubr.f32.mxu0 0.0
        %413 = vmatmul.mubr.f32.gmra.mrb[0].mxu0 %v295
        %v414 = vpop.f32.mrb[0].mxu0
        %v415 = vadd.f32 %v282, %v414
        %v416 = vpop.f32.mrb[0].mxu0
        %417 = vmatprep.mubr.f32.mxu0 0.0
        %418 = vmatmul.mubr.f32.gmra.mrb[0].mxu0 %v298
        %v419 = vpop.f32.mrb[0].mxu0
        %v420 = vadd.f32 %v282, %v419
        %v421 = vpop.f32.mrb[0].mxu0
        %422 = vmatprep.mubr.f32.mxu0 0.0
        %423 = vmatmul.mubr.f32.gmra.mrb[0].mxu0 %v301
        %v424 = vpop.f32.mrb[0].mxu0
        %v425 = vadd.f32 %v282, %v424
        %v426 = vpop.f32.mrb[0].mxu0
        %427 = vmatprep.mubr.f32.mxu0 0.0
        %428 = vmatmul.mubr.f32.gmra.mrb[0].mxu0 %v304
        %v429 = vpop.f32.mrb[0].mxu0
        %v430 = vadd.f32 %v282, %v429
        %v431 = vpop.f32.mrb[0].mxu0
        %432 = vmatprep.mubr.f32.mxu0 0.0
        %433 = vmatmul.mubr.f32.gmra.mrb[0].mxu0 %v307
        %v434 = vpop.f32.mrb[0].mxu0
        %v435 = vadd.f32 %v282, %v434
        %v436 = vpop.f32.mrb[0].mxu0
        %437 = vmatprep.mubr.f32.mxu0 0.0
        %438 = vmatmul.mubr.f32.gmra.mrb[0].mxu0 %v310
        %v439 = vpop.f32.mrb[0].mxu0
        %v440 = vadd.f32 %v282, %v439
        %v441 = vpop.f32.mrb[0].mxu0
        %442 = vmatprep.mubr.f32.mxu0 0.0
        %443 = vmatmul.mubr.f32.gmra.mrb[0].mxu0 %v313
        %v444 = vpop.f32.mrb[0].mxu0
        %v445 = vadd.f32 %v282, %v444
        %v446 = vpop.f32.mrb[0].mxu0
        %447 = vmatprep.mubr.f32.mxu0 0.0
        %448 = vmatmul.mubr.f32.gmra.mrb[0].mxu0 %v316
        %v449 = vpop.f32.mrb[0].mxu0
        %v450 = vadd.f32 %v282, %v449
        %v451 = vpop.f32.mrb[0].mxu0
        %452 = vmatprep.mubr.f32.mxu0 0.0
        %453 = vmatmul.mubr.f32.gmra.mrb[0].mxu0 %v319
        %v454 = vpop.f32.mrb[0].mxu0
        %v455 = vadd.f32 %v282, %v454
        %v456 = vpop.f32.mrb[0].mxu0
        %457 = vmatprep.mubr.f32.mxu0 0.0
        %458 = vmatmul.mubr.f32.gmra.mrb[0].mxu0 %v322
        %v459 = vpop.f32.mrb[0].mxu0
        %v460 = vadd.f32 %v282, %v459
        %v461 = vpop.f32.mrb[0].mxu0
        %462 = vmatprep.mubr.f32.mxu0 0.0
        %463 = vmatmul.mubr.f32.gmra.mrb[0].mxu0 %v325
        %v464 = vpop.f32.mrb[0].mxu0
        %v465 = vadd.f32 %v282, %v464
        %v466 = vpop.f32.mrb[0].mxu0
        %467 = vmatprep.mubr.f32.mxu0 0.0
        %468 = vmatmul.mubr.f32.gmra.mrb[0].mxu0 %v328
        %v469 = vpop.f32.mrb[0].mxu0
        %v470 = vadd.f32 %v282, %v469
        %v471 = vpop.f32.mrb[0].mxu0
        %472 = vmatprep.mubr.f32.mxu0 0.0
        %473 = vmatmul.mubr.f32.gmra.mrb[0].mxu0 %v331
        %v474 = vpop.f32.mrb[0].mxu0
        %v475 = vadd.f32 %v282, %v474
        %v476 = vpop.f32.mrb[0].mxu0
        %477 = vdwg.mxu0
        %v478 = vmax.f32 %v400, 0.0
        %v479 = vmax.f32 %v405, 0.0
        %v480 = vmax.f32 %v410, 0.0
        %v481 = vmax.f32 %v415, 0.0
        %v482 = vmax.f32 %v420, 0.0
        %v483 = vmax.f32 %v425, 0.0
        %v484 = vmax.f32 %v430, 0.0
        %v485 = vmax.f32 %v435, 0.0
        %v486 = vmax.f32 %v440, 0.0
        %v487 = vmax.f32 %v445, 0.0
        %v488 = vmax.f32 %v450, 0.0
        %v489 = vmax.f32 %v455, 0.0
        %v490 = vmax.f32 %v460, 0.0
        %v491 = vmax.f32 %v465, 0.0
        %v492 = vmax.f32 %v470, 0.0
        %v493 = vmax.f32 %v475, 0.0
        %v494 = vld [vmem:[%s3] sm:$0xff]
        %v495 = vld [vmem:[%s3 + $0x8] sm:$0xff]
        %v496 = vld [vmem:[%s3 + $0x10] sm:$0xff]
        %v497 = vld [vmem:[%s3 + $0x18] sm:$0xff]
        %v498 = vld [vmem:[%s3 + $0x20] sm:$0xff]
        %v499 = vld [vmem:[%s3 + $0x28] sm:$0xff]
        %v500 = vld [vmem:[%s3 + $0x30] sm:$0xff]
        %v501 = vld [vmem:[%s3 + $0x38] sm:$0xff]
        %v502 = vld [vmem:[%s3 + $0x40] sm:$0xff]
        %v503 = vld [vmem:[%s3 + $0x48] sm:$0xff]
        %v504 = vld [vmem:[%s3 + $0x50] sm:$0xff]
        %v505 = vld [vmem:[%s3 + $0x58] sm:$0xff]
        %v506 = vld [vmem:[%s3 + $0x60] sm:$0xff]
        %v507 = vld [vmem:[%s3 + $0x68] sm:$0xff]
        %v508 = vld [vmem:[%s3 + $0x70] sm:$0xff]
        %v509 = vld [vmem:[%s3 + $0x78] sm:$0xff]
        %v510 = vld [vmem:[%s4] sm:$0x1]
        %v512 = vlaneseq
        %v513 = vshrl.u32 %v512, 7
        %v514 = vsub.s32 0, %v513
        %v515 = vrot.slane %v510, %v514
        %517 = vmatprep.subr.mxu0 0.0
        %518 = vmatpush1.msra.mxu0 %v494
        %519 = vmatprep.subr.mxu0 0.0
        %520 = vmatpush1.msra.mxu0 %v495
        %521 = vmatprep.subr.mxu0 0.0
        %522 = vmatpush1.msra.mxu0 %v496
        %523 = vmatprep.subr.mxu0 0.0
        %524 = vmatpush1.msra.mxu0 %v497
        %525 = vmatprep.subr.mxu0 0.0
        %526 = vmatpush1.msra.mxu0 %v498
        %527 = vmatprep.subr.mxu0 0.0
        %528 = vmatpush1.msra.mxu0 %v499
        %529 = vmatprep.subr.mxu0 0.0
        %530 = vmatpush1.msra.mxu0 %v500
        %531 = vmatprep.subr.mxu0 0.0
        %532 = vmatpush1.msra.mxu0 %v501
        %533 = vmatprep.subr.mxu0 0.0
        %534 = vmatpush1.msra.mxu0 %v502
        %535 = vmatprep.subr.mxu0 0.0
        %536 = vmatpush1.msra.mxu0 %v503
        %537 = vmatprep.subr.mxu0 0.0
        %538 = vmatpush1.msra.mxu0 %v504
        %539 = vmatprep.subr.mxu0 0.0
        %540 = vmatpush1.msra.mxu0 %v505
        %541 = vmatprep.subr.mxu0 0.0
        %542 = vmatpush1.msra.mxu0 %v506
        %543 = vmatprep.subr.mxu0 0.0
        %544 = vmatpush1.msra.mxu0 %v507
        %545 = vmatprep.subr.mxu0 0.0
        %546 = vmatpush1.msra.mxu0 %v508
        %547 = vmatprep.subr.mxu0 0.0
        %548 = vmatpush1.msra.mxu0 %v509
        %549 = vmatprep.subr.mxu0 0.0
        %550 = vmatpush1.msra.mxu0 0.0
        %551 = vmatprep.subr.mxu0 0.0
        %552 = vmatpush1.msra.mxu0 0.0
        %553 = vmatprep.subr.mxu0 0.0
        %554 = vmatpush1.msra.mxu0 0.0
        %555 = vmatprep.subr.mxu0 0.0
        %556 = vmatpush1.msra.mxu0 0.0
        %557 = vmatprep.subr.mxu0 0.0
        %558 = vmatpush1.msra.mxu0 0.0
        %559 = vmatprep.subr.mxu0 0.0
        %560 = vmatpush1.msra.mxu0 0.0
        %561 = vmatprep.subr.mxu0 0.0
        %562 = vmatpush1.msra.mxu0 0.0
        %563 = vmatprep.subr.mxu0 0.0
        %564 = vmatpush1.msra.mxu0 0.0
        %565 = vmatprep.subr.mxu0 0.0
        %566 = vmatpush1.msra.mxu0 0.0
        %567 = vmatprep.subr.mxu0 0.0
        %568 = vmatpush1.msra.mxu0 0.0
        %569 = vmatprep.subr.mxu0 0.0
        %570 = vmatpush1.msra.mxu0 0.0
        %571 = vmatprep.subr.mxu0 0.0
        %572 = vmatpush1.msra.mxu0 0.0
        %573 = vmatprep.subr.mxu0 0.0
        %574 = vmatpush1.msra.mxu0 0.0
        %575 = vmatprep.subr.mxu0 0.0
        %576 = vmatpush1.msra.mxu0 0.0
        %577 = vmatprep.subr.mxu0 0.0
        %578 = vmatpush1.msra.mxu0 0.0
        %579 = vmatprep.subr.mxu0 0.0
        %580 = vmatpush1.msra.mxu0 0.0
        %581 = vmatprep.mubr.f32.mxu0 0.0
        %582 = vmatmul.mubr.f32.gmra.mrb[0].mxu0 %v478
        %v583 = vpop.f32.mrb[0].mxu0
        %v584 = vadd.f32 %v515, %v583
        %v585 = vpop.f32.mrb[0].mxu0
        %586 = vmatprep.mubr.f32.mxu0 0.0
        %587 = vmatmul.mubr.f32.gmra.mrb[0].mxu0 %v479
        %v588 = vpop.f32.mrb[0].mxu0
        %v589 = vadd.f32 %v515, %v588
        %v590 = vpop.f32.mrb[0].mxu0
        %591 = vmatprep.mubr.f32.mxu0 0.0
        %592 = vmatmul.mubr.f32.gmra.mrb[0].mxu0 %v480
        %v593 = vpop.f32.mrb[0].mxu0
        %v594 = vadd.f32 %v515, %v593
        %v595 = vpop.f32.mrb[0].mxu0
        %596 = vmatprep.mubr.f32.mxu0 0.0
        %597 = vmatmul.mubr.f32.gmra.mrb[0].mxu0 %v481
        %v598 = vpop.f32.mrb[0].mxu0
        %v599 = vadd.f32 %v515, %v598
        %v600 = vpop.f32.mrb[0].mxu0
        %601 = vmatprep.mubr.f32.mxu0 0.0
        %602 = vmatmul.mubr.f32.gmra.mrb[0].mxu0 %v482
        %v603 = vpop.f32.mrb[0].mxu0
        %v604 = vadd.f32 %v515, %v603
        %v605 = vpop.f32.mrb[0].mxu0
        %606 = vmatprep.mubr.f32.mxu0 0.0
        %607 = vmatmul.mubr.f32.gmra.mrb[0].mxu0 %v483
        %v608 = vpop.f32.mrb[0].mxu0
        %v609 = vadd.f32 %v515, %v608
        %v610 = vpop.f32.mrb[0].mxu0
        %611 = vmatprep.mubr.f32.mxu0 0.0
        %612 = vmatmul.mubr.f32.gmra.mrb[0].mxu0 %v484
        %v613 = vpop.f32.mrb[0].mxu0
        %v614 = vadd.f32 %v515, %v613
        %v615 = vpop.f32.mrb[0].mxu0
        %616 = vmatprep.mubr.f32.mxu0 0.0
        %617 = vmatmul.mubr.f32.gmra.mrb[0].mxu0 %v485
        %v618 = vpop.f32.mrb[0].mxu0
        %v619 = vadd.f32 %v515, %v618
        %v620 = vpop.f32.mrb[0].mxu0
        %621 = vmatprep.mubr.f32.mxu0 0.0
        %622 = vmatmul.mubr.f32.gmra.mrb[0].mxu0 %v486
        %v623 = vpop.f32.mrb[0].mxu0
        %v624 = vadd.f32 %v515, %v623
        %v625 = vpop.f32.mrb[0].mxu0
        %626 = vmatprep.mubr.f32.mxu0 0.0
        %627 = vmatmul.mubr.f32.gmra.mrb[0].mxu0 %v487
        %v628 = vpop.f32.mrb[0].mxu0
        %v629 = vadd.f32 %v515, %v628
        %v630 = vpop.f32.mrb[0].mxu0
        %631 = vmatprep.mubr.f32.mxu0 0.0
        %632 = vmatmul.mubr.f32.gmra.mrb[0].mxu0 %v488
        %v633 = vpop.f32.mrb[0].mxu0
        %v634 = vadd.f32 %v515, %v633
        %v635 = vpop.f32.mrb[0].mxu0
        %636 = vmatprep.mubr.f32.mxu0 0.0
        %637 = vmatmul.mubr.f32.gmra.mrb[0].mxu0 %v489
        %v638 = vpop.f32.mrb[0].mxu0
        %v639 = vadd.f32 %v515, %v638
        %v640 = vpop.f32.mrb[0].mxu0
        %641 = vmatprep.mubr.f32.mxu0 0.0
        %642 = vmatmul.mubr.f32.gmra.mrb[0].mxu0 %v490
        %v643 = vpop.f32.mrb[0].mxu0
        %v644 = vadd.f32 %v515, %v643
        %v645 = vpop.f32.mrb[0].mxu0
        %646 = vmatprep.mubr.f32.mxu0 0.0
        %647 = vmatmul.mubr.f32.gmra.mrb[0].mxu0 %v491
        %v648 = vpop.f32.mrb[0].mxu0
        %v649 = vadd.f32 %v515, %v648
        %v650 = vpop.f32.mrb[0].mxu0
        %651 = vmatprep.mubr.f32.mxu0 0.0
        %652 = vmatmul.mubr.f32.gmra.mrb[0].mxu0 %v492
        %v653 = vpop.f32.mrb[0].mxu0
        %v654 = vadd.f32 %v515, %v653
        %v655 = vpop.f32.mrb[0].mxu0
        %656 = vmatprep.mubr.f32.mxu0 0.0
        %657 = vmatmul.mubr.f32.gmra.mrb[0].mxu0 %v493
        %v658 = vpop.f32.mrb[0].mxu0
        %v659 = vadd.f32 %v515, %v658
        %v660 = vpop.f32.mrb[0].mxu0
        %661 = vdwg.mxu0
        %v662 = vld [vmem:[%s5] sm:$0xff]
        %v663 = vld [vmem:[%s5 + $0x8] sm:$0xff]
        %v664 = vld [vmem:[%s5 + $0x10] sm:$0xff]
        %v665 = vld [vmem:[%s5 + $0x18] sm:$0xff]
        %v666 = vmul.f32 %v584, %v584
        %v667 = vmul.f32 %v589, %v589
        %v668 = vmul.f32 %v594, %v594
        %v669 = vmul.f32 %v599, %v599
        %v670 = vmul.f32 %v604, %v604
        %v671 = vmul.f32 %v609, %v609
        %v672 = vmul.f32 %v614, %v614
        %v673 = vmul.f32 %v619, %v619
        %v674 = vmul.f32 %v624, %v624
        %v675 = vmul.f32 %v629, %v629
        %v676 = vmul.f32 %v634, %v634
        %v677 = vmul.f32 %v639, %v639
        %v678 = vmul.f32 %v644, %v644
        %v679 = vmul.f32 %v649, %v649
        %v680 = vmul.f32 %v654, %v654
        %v681 = vmul.f32 %v659, %v659
        %vm682 = vcmask 261120
        %v683 = vsel %vm682, %v666, 0.0
        %684 = vadd.xlane.f32.xlu0 %v683
        %v685 = vpop.xlane.xlu0 %684
        %v686 = vsel %vm682, %v667, 0.0
        %687 = vadd.xlane.f32.xlu0 %v686
        %v688 = vpop.xlane.xlu0 %687
        %v689 = vsel %vm682, %v668, 0.0
        %690 = vadd.xlane.f32.xlu0 %v689
        %v691 = vpop.xlane.xlu0 %690
        %v692 = vsel %vm682, %v669, 0.0
        %693 = vadd.xlane.f32.xlu0 %v692
        %v694 = vpop.xlane.xlu0 %693
        %v695 = vsel %vm682, %v670, 0.0
        %696 = vadd.xlane.f32.xlu0 %v695
        %v697 = vpop.xlane.xlu0 %696
        %v698 = vsel %vm682, %v671, 0.0
        %699 = vadd.xlane.f32.xlu0 %v698
        %v700 = vpop.xlane.xlu0 %699
        %v701 = vsel %vm682, %v672, 0.0
        %702 = vadd.xlane.f32.xlu0 %v701
        %v703 = vpop.xlane.xlu0 %702
        %v704 = vsel %vm682, %v673, 0.0
        %705 = vadd.xlane.f32.xlu0 %v704
        %v706 = vpop.xlane.xlu0 %705
        %v707 = vsel %vm682, %v674, 0.0
        %708 = vadd.xlane.f32.xlu0 %v707
        %v709 = vpop.xlane.xlu0 %708
        %v710 = vsel %vm682, %v675, 0.0
        %711 = vadd.xlane.f32.xlu0 %v710
        %v712 = vpop.xlane.xlu0 %711
        %v713 = vsel %vm682, %v676, 0.0
        %714 = vadd.xlane.f32.xlu0 %v713
        %v715 = vpop.xlane.xlu0 %714
        %v716 = vsel %vm682, %v677, 0.0
        %717 = vadd.xlane.f32.xlu0 %v716
        %v718 = vpop.xlane.xlu0 %717
        %v719 = vsel %vm682, %v678, 0.0
        %720 = vadd.xlane.f32.xlu0 %v719
        %v721 = vpop.xlane.xlu0 %720
        %v722 = vsel %vm682, %v679, 0.0
        %723 = vadd.xlane.f32.xlu0 %v722
        %v724 = vpop.xlane.xlu0 %723
        %v725 = vsel %vm682, %v680, 0.0
        %726 = vadd.xlane.f32.xlu0 %v725
        %v727 = vpop.xlane.xlu0 %726
        %v728 = vsel %vm682, %v681, 0.0
        %729 = vadd.xlane.f32.xlu0 %v728
        %v730 = vpop.xlane.xlu0 %729
        %v731 = vmul.f32 %v662, %v662
        %v732 = vmul.f32 %v663, %v663
        %v733 = vmul.f32 %v664, %v664
        %v734 = vmul.f32 %v665, %v665
        %v735 = vadd.f32 %v731, %v732
        %v736 = vadd.f32 %v735, %v733
        %v737 = vadd.f32 %v736, %v734
        %v738 = vrot.slane %v737, 4
        %v739 = vadd.f32 %v737, %v738
        %v740 = vrot.slane %v739, 2
        %v741 = vadd.f32 %v739, %v740
        %v742 = vrot.slane %v741, 1
        %v743 = vadd.f32 %v741, %v742
        %v745 = vsel %vm682, %v584, 0
        %v748 = vsel %vm682, %v589, 0
        %v751 = vsel %vm682, %v594, 0
        %v754 = vsel %vm682, %v599, 0
        %v757 = vsel %vm682, %v604, 0
        %v760 = vsel %vm682, %v609, 0
        %v763 = vsel %vm682, %v614, 0
        %v766 = vsel %vm682, %v619, 0
        %v769 = vsel %vm682, %v624, 0
        %v772 = vsel %vm682, %v629, 0
        %v775 = vsel %vm682, %v634, 0
        %v778 = vsel %vm682, %v639, 0
        %v781 = vsel %vm682, %v644, 0
        %v784 = vsel %vm682, %v649, 0
        %v787 = vsel %vm682, %v654, 0
        %v790 = vsel %vm682, %v659, 0
        %792 = vmatprep.subr.mxu0 0.0
        %793 = vmatpush1.msra.mxu0 %v662
        %794 = vmatprep.subr.mxu0 0.0
        %795 = vmatpush1.msra.mxu0 %v663
        %796 = vmatprep.subr.mxu0 0.0
        %797 = vmatpush1.msra.mxu0 %v664
        %798 = vmatprep.subr.mxu0 0.0
        %799 = vmatpush1.msra.mxu0 %v665
        %800 = vmatprep.subr.mxu0 0.0
        %801 = vmatpush1.msra.mxu0 0.0
        %802 = vmatprep.subr.mxu0 0.0
        %803 = vmatpush1.msra.mxu0 0.0
        %804 = vmatprep.subr.mxu0 0.0
        %805 = vmatpush1.msra.mxu0 0.0
        %806 = vmatprep.subr.mxu0 0.0
        %807 = vmatpush1.msra.mxu0 0.0
        %808 = vmatprep.subr.mxu0 0.0
        %809 = vmatpush1.msra.mxu0 0.0
        %810 = vmatprep.subr.mxu0 0.0
        %811 = vmatpush1.msra.mxu0 0.0
        %812 = vmatprep.subr.mxu0 0.0
        %813 = vmatpush1.msra.mxu0 0.0
        %814 = vmatprep.subr.mxu0 0.0
        %815 = vmatpush1.msra.mxu0 0.0
        %816 = vmatprep.subr.mxu0 0.0
        %817 = vmatpush1.msra.mxu0 0.0
        %818 = vmatprep.subr.mxu0 0.0
        %819 = vmatpush1.msra.mxu0 0.0
        %820 = vmatprep.subr.mxu0 0.0
        %821 = vmatpush1.msra.mxu0 0.0
        %822 = vmatprep.subr.mxu0 0.0
        %823 = vmatpush1.msra.mxu0 0.0
        %824 = vmatprep.subr.mxu0 0.0
        %825 = vmatpush1.msra.mxu0 0.0
        %826 = vmatprep.subr.mxu0 0.0
        %827 = vmatpush1.msra.mxu0 0.0
        %828 = vmatprep.subr.mxu0 0.0
        %829 = vmatpush1.msra.mxu0 0.0
        %830 = vmatprep.subr.mxu0 0.0
        %831 = vmatpush1.msra.mxu0 0.0
        %832 = vmatprep.subr.mxu0 0.0
        %833 = vmatpush1.msra.mxu0 0.0
        %834 = vmatprep.subr.mxu0 0.0
        %835 = vmatpush1.msra.mxu0 0.0
        %836 = vmatprep.subr.mxu0 0.0
        %837 = vmatpush1.msra.mxu0 0.0
        %838 = vmatprep.subr.mxu0 0.0
        %839 = vmatpush1.msra.mxu0 0.0
        %840 = vmatprep.subr.mxu0 0.0
        %841 = vmatpush1.msra.mxu0 0.0
        %842 = vmatprep.subr.mxu0 0.0
        %843 = vmatpush1.msra.mxu0 0.0
        %844 = vmatprep.subr.mxu0 0.0
        %845 = vmatpush1.msra.mxu0 0.0
        %846 = vmatprep.subr.mxu0 0.0
        %847 = vmatpush1.msra.mxu0 0.0
        %848 = vmatprep.subr.mxu0 0.0
        %849 = vmatpush1.msra.mxu0 0.0
        %850 = vmatprep.subr.mxu0 0.0
        %851 = vmatpush1.msra.mxu0 0.0
        %852 = vmatprep.subr.mxu0 0.0
        %853 = vmatpush1.msra.mxu0 0.0
        %854 = vmatprep.subr.mxu0 0.0
        %855 = vmatpush1.msra.mxu0 0.0
        %856 = vmatprep.mubr.f32.mxu0 0.0
        %857 = vmatmul.mubr.f32.gmra.mrb[0].mxu0 %v745
        %v858 = vpop.f32.mrb[0].mxu0
        %v859 = vadd.f32 0.0, %v858
        %v860 = vpop.f32.mrb[0].mxu0
        %861 = vmatprep.mubr.f32.mxu0 0.0
        %862 = vmatmul.mubr.f32.gmra.mrb[0].mxu0 %v748
        %v863 = vpop.f32.mrb[0].mxu0
        %v864 = vadd.f32 0.0, %v863
        %v865 = vpop.f32.mrb[0].mxu0
        %866 = vmatprep.mubr.f32.mxu0 0.0
        %867 = vmatmul.mubr.f32.gmra.mrb[0].mxu0 %v751
        %v868 = vpop.f32.mrb[0].mxu0
        %v869 = vadd.f32 0.0, %v868
        %v870 = vpop.f32.mrb[0].mxu0
        %871 = vmatprep.mubr.f32.mxu0 0.0
        %872 = vmatmul.mubr.f32.gmra.mrb[0].mxu0 %v754
        %v873 = vpop.f32.mrb[0].mxu0
        %v874 = vadd.f32 0.0, %v873
        %v875 = vpop.f32.mrb[0].mxu0
        %876 = vmatprep.mubr.f32.mxu0 0.0
        %877 = vmatmul.mubr.f32.gmra.mrb[0].mxu0 %v757
        %v878 = vpop.f32.mrb[0].mxu0
        %v879 = vadd.f32 0.0, %v878
        %v880 = vpop.f32.mrb[0].mxu0
        %881 = vmatprep.mubr.f32.mxu0 0.0
        %882 = vmatmul.mubr.f32.gmra.mrb[0].mxu0 %v760
        %v883 = vpop.f32.mrb[0].mxu0
        %v884 = vadd.f32 0.0, %v883
        %v885 = vpop.f32.mrb[0].mxu0
        %886 = vmatprep.mubr.f32.mxu0 0.0
        %887 = vmatmul.mubr.f32.gmra.mrb[0].mxu0 %v763
        %v888 = vpop.f32.mrb[0].mxu0
        %v889 = vadd.f32 0.0, %v888
        %v890 = vpop.f32.mrb[0].mxu0
        %891 = vmatprep.mubr.f32.mxu0 0.0
        %892 = vmatmul.mubr.f32.gmra.mrb[0].mxu0 %v766
        %v893 = vpop.f32.mrb[0].mxu0
        %v894 = vadd.f32 0.0, %v893
        %v895 = vpop.f32.mrb[0].mxu0
        %896 = vmatprep.mubr.f32.mxu0 0.0
        %897 = vmatmul.mubr.f32.gmra.mrb[0].mxu0 %v769
        %v898 = vpop.f32.mrb[0].mxu0
        %v899 = vadd.f32 0.0, %v898
        %v900 = vpop.f32.mrb[0].mxu0
        %901 = vmatprep.mubr.f32.mxu0 0.0
        %902 = vmatmul.mubr.f32.gmra.mrb[0].mxu0 %v772
        %v903 = vpop.f32.mrb[0].mxu0
        %v904 = vadd.f32 0.0, %v903
        %v905 = vpop.f32.mrb[0].mxu0
        %906 = vmatprep.mubr.f32.mxu0 0.0
        %907 = vmatmul.mubr.f32.gmra.mrb[0].mxu0 %v775
        %v908 = vpop.f32.mrb[0].mxu0
        %v909 = vadd.f32 0.0, %v908
        %v910 = vpop.f32.mrb[0].mxu0
        %911 = vmatprep.mubr.f32.mxu0 0.0
        %912 = vmatmul.mubr.f32.gmra.mrb[0].mxu0 %v778
        %v913 = vpop.f32.mrb[0].mxu0
        %v914 = vadd.f32 0.0, %v913
        %v915 = vpop.f32.mrb[0].mxu0
        %916 = vmatprep.mubr.f32.mxu0 0.0
        %917 = vmatmul.mubr.f32.gmra.mrb[0].mxu0 %v781
        %v918 = vpop.f32.mrb[0].mxu0
        %v919 = vadd.f32 0.0, %v918
        %v920 = vpop.f32.mrb[0].mxu0
        %921 = vmatprep.mubr.f32.mxu0 0.0
        %922 = vmatmul.mubr.f32.gmra.mrb[0].mxu0 %v784
        %v923 = vpop.f32.mrb[0].mxu0
        %v924 = vadd.f32 0.0, %v923
        %v925 = vpop.f32.mrb[0].mxu0
        %926 = vmatprep.mubr.f32.mxu0 0.0
        %927 = vmatmul.mubr.f32.gmra.mrb[0].mxu0 %v787
        %v928 = vpop.f32.mrb[0].mxu0
        %v929 = vadd.f32 0.0, %v928
        %v930 = vpop.f32.mrb[0].mxu0
        %931 = vmatprep.mubr.f32.mxu0 0.0
        %932 = vmatmul.mubr.f32.gmra.mrb[0].mxu0 %v790
        %v933 = vpop.f32.mrb[0].mxu0
        %v934 = vadd.f32 0.0, %v933
        %v935 = vpop.f32.mrb[0].mxu0
        %936 = vdwg.mxu0
        %v937 = vmul.f32 %v859, 2.0
        %v938 = vmul.f32 %v864, 2.0
        %v939 = vmul.f32 %v869, 2.0
        %v940 = vmul.f32 %v874, 2.0
        %v941 = vmul.f32 %v879, 2.0
        %v942 = vmul.f32 %v884, 2.0
        %v943 = vmul.f32 %v889, 2.0
        %v944 = vmul.f32 %v894, 2.0
        %v945 = vmul.f32 %v899, 2.0
        %v946 = vmul.f32 %v904, 2.0
        %v947 = vmul.f32 %v909, 2.0
        %v948 = vmul.f32 %v914, 2.0
        %v949 = vmul.f32 %v919, 2.0
        %v950 = vmul.f32 %v924, 2.0
        %v951 = vmul.f32 %v929, 2.0
        %v952 = vmul.f32 %v934, 2.0
        %v953 = vsub.f32 %v685, %v937
        %v954 = vsub.f32 %v688, %v938
        %v955 = vsub.f32 %v691, %v939
        %v956 = vsub.f32 %v694, %v940
        %v957 = vsub.f32 %v697, %v941
        %v958 = vsub.f32 %v700, %v942
        %v959 = vsub.f32 %v703, %v943
        %v960 = vsub.f32 %v706, %v944
        %v961 = vsub.f32 %v709, %v945
        %v962 = vsub.f32 %v712, %v946
        %v963 = vsub.f32 %v715, %v947
        %v964 = vsub.f32 %v718, %v948
        %v965 = vsub.f32 %v721, %v949
        %v966 = vsub.f32 %v724, %v950
        %v967 = vsub.f32 %v727, %v951
        %v968 = vsub.f32 %v730, %v952
        %v969 = vadd.f32 %v953, %v743
        %v970 = vadd.f32 %v954, %v743
        %v971 = vadd.f32 %v955, %v743
        %v972 = vadd.f32 %v956, %v743
        %v973 = vadd.f32 %v957, %v743
        %v974 = vadd.f32 %v958, %v743
        %v975 = vadd.f32 %v959, %v743
        %v976 = vadd.f32 %v960, %v743
        %v977 = vadd.f32 %v961, %v743
        %v978 = vadd.f32 %v962, %v743
        %v979 = vadd.f32 %v963, %v743
        %v980 = vadd.f32 %v964, %v743
        %v981 = vadd.f32 %v965, %v743
        %v982 = vadd.f32 %v966, %v743
        %v983 = vadd.f32 %v967, %v743
        %v984 = vadd.f32 %v968, %v743
        %v985 = vmax.f32 %v969, 0.0
        %v986 = vmax.f32 %v970, 0.0
        %v987 = vmax.f32 %v971, 0.0
        %v988 = vmax.f32 %v972, 0.0
        %v989 = vmax.f32 %v973, 0.0
        %v990 = vmax.f32 %v974, 0.0
        %v991 = vmax.f32 %v975, 0.0
        %v992 = vmax.f32 %v976, 0.0
        %v993 = vmax.f32 %v977, 0.0
        %v994 = vmax.f32 %v978, 0.0
        %v995 = vmax.f32 %v979, 0.0
        %v996 = vmax.f32 %v980, 0.0
        %v997 = vmax.f32 %v981, 0.0
        %v998 = vmax.f32 %v982, 0.0
        %v999 = vmax.f32 %v983, 0.0
        %v1000 = vmax.f32 %v984, 0.0
        %v1001 = vadd.f32 %v985, 1.0
        %v1002 = vadd.f32 %v986, 1.0
        %v1003 = vadd.f32 %v987, 1.0
        %v1004 = vadd.f32 %v988, 1.0
        %v1005 = vadd.f32 %v989, 1.0
        %v1006 = vadd.f32 %v990, 1.0
        %v1007 = vadd.f32 %v991, 1.0
        %v1008 = vadd.f32 %v992, 1.0
        %v1009 = vadd.f32 %v993, 1.0
        %v1010 = vadd.f32 %v994, 1.0
        %v1011 = vadd.f32 %v995, 1.0
        %v1012 = vadd.f32 %v996, 1.0
        %v1013 = vadd.f32 %v997, 1.0
        %v1014 = vadd.f32 %v998, 1.0
        %v1015 = vadd.f32 %v999, 1.0
        %v1016 = vadd.f32 %v1000, 1.0
        %v1017 = vrcp.pop %v1001
        %v1018 = vrcp.pop %v1002
        %v1019 = vrcp.pop %v1003
        %v1020 = vrcp.pop %v1004
        %v1021 = vrcp.pop %v1005
        %v1022 = vrcp.pop %v1006
        %v1023 = vrcp.pop %v1007
        %v1024 = vrcp.pop %v1008
        %v1025 = vrcp.pop %v1009
        %v1026 = vrcp.pop %v1010
        %v1027 = vrcp.pop %v1011
        %v1028 = vrcp.pop %v1012
        %v1029 = vrcp.pop %v1013
        %v1030 = vrcp.pop %v1014
        %v1031 = vrcp.pop %v1015
        %v1032 = vrcp.pop %v1016
        %v1033 = vlaneseq
        %v1034 = vand.u32 %v1033, 127
        %vm1035 = vcmp.lt.s32.totalorder %v1034, 16
        %v1036 = vsel %vm1035, %v1017, 0.0
        %v1037 = vsel %vm1035, %v1018, 0.0
        %v1038 = vsel %vm1035, %v1019, 0.0
        %v1039 = vsel %vm1035, %v1020, 0.0
        %v1040 = vsel %vm1035, %v1021, 0.0
        %v1041 = vsel %vm1035, %v1022, 0.0
        %v1042 = vsel %vm1035, %v1023, 0.0
        %v1043 = vsel %vm1035, %v1024, 0.0
        %v1044 = vsel %vm1035, %v1025, 0.0
        %v1045 = vsel %vm1035, %v1026, 0.0
        %v1046 = vsel %vm1035, %v1027, 0.0
        %v1047 = vsel %vm1035, %v1028, 0.0
        %v1048 = vsel %vm1035, %v1029, 0.0
        %v1049 = vsel %vm1035, %v1030, 0.0
        %v1050 = vsel %vm1035, %v1031, 0.0
        %v1051 = vsel %vm1035, %v1032, 0.0
        %1052 = vadd.xlane.f32.xlu0 %v1036
        %v1053 = vpop.xlane.xlu0 %1052
        %1054 = vadd.xlane.f32.xlu0 %v1037
        %v1055 = vpop.xlane.xlu0 %1054
        %1056 = vadd.xlane.f32.xlu0 %v1038
        %v1057 = vpop.xlane.xlu0 %1056
        %1058 = vadd.xlane.f32.xlu0 %v1039
        %v1059 = vpop.xlane.xlu0 %1058
        %1060 = vadd.xlane.f32.xlu0 %v1040
        %v1061 = vpop.xlane.xlu0 %1060
        %1062 = vadd.xlane.f32.xlu0 %v1041
        %v1063 = vpop.xlane.xlu0 %1062
        %1064 = vadd.xlane.f32.xlu0 %v1042
        %v1065 = vpop.xlane.xlu0 %1064
        %1066 = vadd.xlane.f32.xlu0 %v1043
        %v1067 = vpop.xlane.xlu0 %1066
        %1068 = vadd.xlane.f32.xlu0 %v1044
        %v1069 = vpop.xlane.xlu0 %1068
        %1070 = vadd.xlane.f32.xlu0 %v1045
        %v1071 = vpop.xlane.xlu0 %1070
        %1072 = vadd.xlane.f32.xlu0 %v1046
        %v1073 = vpop.xlane.xlu0 %1072
        %1074 = vadd.xlane.f32.xlu0 %v1047
        %v1075 = vpop.xlane.xlu0 %1074
        %1076 = vadd.xlane.f32.xlu0 %v1048
        %v1077 = vpop.xlane.xlu0 %1076
        %1078 = vadd.xlane.f32.xlu0 %v1049
        %v1079 = vpop.xlane.xlu0 %1078
        %1080 = vadd.xlane.f32.xlu0 %v1050
        %v1081 = vpop.xlane.xlu0 %1080
        %1082 = vadd.xlane.f32.xlu0 %v1051
        %v1083 = vpop.xlane.xlu0 %1082
        %v1084 = vrcp.pop %v1053
        %v1085 = vrcp.pop %v1055
        %v1086 = vrcp.pop %v1057
        %v1087 = vrcp.pop %v1059
        %v1088 = vrcp.pop %v1061
        %v1089 = vrcp.pop %v1063
        %v1090 = vrcp.pop %v1065
        %v1091 = vrcp.pop %v1067
        %v1092 = vrcp.pop %v1069
        %v1093 = vrcp.pop %v1071
        %v1094 = vrcp.pop %v1073
        %v1095 = vrcp.pop %v1075
        %v1096 = vrcp.pop %v1077
        %v1097 = vrcp.pop %v1079
        %v1098 = vrcp.pop %v1081
        %v1099 = vrcp.pop %v1083
        %v1100 = vmul.f32 %v1036, %v1084
        %v1101 = vmul.f32 %v1037, %v1085
        %v1102 = vmul.f32 %v1038, %v1086
        %v1103 = vmul.f32 %v1039, %v1087
        %v1104 = vmul.f32 %v1040, %v1088
        %v1105 = vmul.f32 %v1041, %v1089
        %v1106 = vmul.f32 %v1042, %v1090
        %v1107 = vmul.f32 %v1043, %v1091
        %v1108 = vmul.f32 %v1044, %v1092
        %v1109 = vmul.f32 %v1045, %v1093
        %v1110 = vmul.f32 %v1046, %v1094
        %v1111 = vmul.f32 %v1047, %v1095
        %v1112 = vmul.f32 %v1048, %v1096
        %v1113 = vmul.f32 %v1049, %v1097
        %v1114 = vmul.f32 %v1050, %v1098
        %v1115 = vmul.f32 %v1051, %v1099
        %1116 = vst [vmem:[%s245] sm:$0xff] %v1100
        %1117 = vst [vmem:[%s245 + $0x8] sm:$0xff] %v1101
        %1118 = vst [vmem:[%s245 + $0x10] sm:$0xff] %v1102
        %1119 = vst [vmem:[%s245 + $0x18] sm:$0xff] %v1103
        %1120 = vst [vmem:[%s245 + $0x20] sm:$0xff] %v1104
        %1121 = vst [vmem:[%s245 + $0x28] sm:$0xff] %v1105
        %1122 = vst [vmem:[%s245 + $0x30] sm:$0xff] %v1106
        %1123 = vst [vmem:[%s245 + $0x38] sm:$0xff] %v1107
        %1124 = vst [vmem:[%s245 + $0x40] sm:$0xff] %v1108
        %1125 = vst [vmem:[%s245 + $0x48] sm:$0xff] %v1109
        %1126 = vst [vmem:[%s245 + $0x50] sm:$0xff] %v1110
        %1127 = vst [vmem:[%s245 + $0x58] sm:$0xff] %v1111
        %1128 = vst [vmem:[%s245 + $0x60] sm:$0xff] %v1112
        %1129 = vst [vmem:[%s245 + $0x68] sm:$0xff] %v1113
        %1130 = vst [vmem:[%s245 + $0x70] sm:$0xff] %v1114
        %1131 = vst [vmem:[%s245 + $0x78] sm:$0xff] %v1115
        %s1132 = sand.u32 %s159, 1
        %s1133 = scalar_lea.sflag [#allocation3], %s1132
        %s1134 = sand.u32 %s159, 1
        %s1135 = smul.addr %s1134, 128
        %s1136 = scalar_lea.vmem [#allocation2], %s1135
        // Predicated region
        $region45: #{tpu_custom_call.1} parent=43 // pred_check
          %p1137 = pneg %p169
        $region46: #{tpu_custom_call.1} parent=43 // pred_check_branch
          %1139 = sbr.rel (%p1137) target = $region48
        $region47: #{tpu_custom_call.1} parent=43 // pred_region
          %s1140 = smul.u32 16, %s20
          %s1142 = ssub.s32 2048, 2048
          %1143 = vsyncadd %s1133, %s1142
          %s1144 = smul.addr %s1140, 128
          %s1145 = scalar_lea.hbm %s6, %s1144
          %s1146 = sshll.u32 %s1136, 4
          %s1147 = int_to_ptr.vmem [resolvable:$true] %s1146
          %1152 = dma.vmem_to_hbm [thread:$0]  %s1147, 2048, %s1145, %s1133, 128, 128, 8
        $region48: #{tpu_custom_call.1} parent=43 // pred_fallthru
          _
      $region44: #{tpu_custom_call.1} parent=5 // pred_fallthru
        _
      %p1153 = scmp.le.s32.totalorder 2, %s15
      // Predicated region
      $region49: #{tpu_custom_call.1} parent=5 // pred_check
        %p1154 = pneg %p1153
      $region50: #{tpu_custom_call.1} parent=5 // pred_check_branch
        %1156 = sbr.rel (%p1154) target = $region52
      $region51: #{tpu_custom_call.1} parent=5 // pred_region
        %s1157 = ssub.s32 %s15, 2
        // Predicated region
        $region53: #{tpu_custom_call.1} parent=51 // pred_check
          %p1158 = pneg %p175
        $region54: #{tpu_custom_call.1} parent=51 // pred_check_branch
          %1160 = sbr.rel (%p1158) target = $region56
        $region55: #{tpu_custom_call.1} parent=51 // pred_region
          %s1161 = sand.u32 %s160, 1
          %s1162 = scalar_lea.sflag [#allocation3], %s1161
          %s1163 = sand.u32 %s160, 1
          %s1164 = smul.addr %s1163, 128
          %s1165 = scalar_lea.vmem [#allocation2], %s1164
          %1166 = dma.done %s1162, 2048
        $region56: #{tpu_custom_call.1} parent=51 // pred_fallthru
          _
      $region52: #{tpu_custom_call.1} parent=5 // pred_fallthru
        _
    $region6: #{tpu_custom_call.1} parent=1 // loop_footer
      %s19 = sadd.s32 1, %s15
    $region7: #{tpu_custom_call.1} parent=1 // loop_footer_branch
      %14 = sbr.rel target = $region3
    $region8: #{tpu_custom_call.1} parent=1 // loop_exit
      _
    %1167 = vsyncpa [#allocation3], 1
    %s1168 = scalar_lea.sflag [#allocation3], 1
    %1169 = vsyncpa %s1168, 1

</llo_original>
